<compile_context>
chip_gen: v7x
topology: tpu7x:2x2x1
jax: 0.10.0
libtpu: 0.0.40
codegen_flags: <defaults>
</compile_context>

<pallas_src>
import functools

import jax
import jax.numpy as jnp
from jax.experimental import pallas as pl
from jax.experimental.pallas import tpu as pltpu

D_IN, D_H1 = 784, 128
D_H2, D_OUT = 64, 10
D_H2_P = 128   # lane-pad hidden2 64 -> 128 (zero pad; exact through ReLU)
D_OUT_P = 16   # small full-array logits width (masked vst, cheap writeback)


def _round_up(n, m):
    return ((n + m - 1) // m) * m


def mlp_kernel(x_ref, w1_ref, b1_ref, w2_ref, b2_ref, w3_ref, b3_ref, o_ref):
    cdt = w1_ref.dtype  # compute dtype (bf16 or f32); accumulation is always f32
    # In-kernel cast: x arrives as a single f32 HBM read; the bf16 cast is
    # vreg-local, so no extra HBM pass is paid for the low-precision MXU path.
    xb = x_ref[...].astype(cdt)
    # fc1 + ReLU
    h1 = jnp.dot(xb, w1_ref[...], preferred_element_type=jnp.float32)
    h1 = jnp.maximum(h1 + b1_ref[...], 0.0).astype(cdt)
    # fc2 + ReLU (lane-padded to 128; zero pad is exact through ReLU)
    h2 = jnp.dot(h1, w2_ref[...], preferred_element_type=jnp.float32)
    h2 = jnp.maximum(h2 + b2_ref[...], 0.0).astype(cdt)
    # fc3 (no activation), narrow (bm, 16) store
    o = jnp.dot(h2, w3_ref[...], preferred_element_type=jnp.float32) + b3_ref[...]
    o_ref[...] = o.astype(o_ref.dtype)


def prepare_params(params, compute_dtype=jnp.bfloat16):
    """Lane-pad / cast the weights ONCE, outside the per-call hot path."""
    w1, b1, w2, b2, w3, b3 = params
    w2p = jnp.zeros((D_H1, D_H2_P), w2.dtype).at[:, :D_H2].set(w2)
    b2p = jnp.zeros((1, D_H2_P), b2.dtype).at[:, :D_H2].set(b2)
    w3p = jnp.zeros((D_H2_P, D_OUT_P), w3.dtype).at[:D_H2, :D_OUT].set(w3)
    b3p = jnp.zeros((1, D_OUT_P), b3.dtype).at[:, :D_OUT].set(b3)
    return (w1.astype(compute_dtype), b1.astype(jnp.float32),
            w2p.astype(compute_dtype), b2p.astype(jnp.float32),
            w3p.astype(compute_dtype), b3p.astype(jnp.float32))


def _pick_bm(B, bm):
    if bm is None:
        # Aim for >= 2 grid steps (v7x megacore) with large tiles (amortize the
        # ~0.35 us/step overhead), capped at 1024 rows so f32 x double-buffer
        # stays ~6.4 MB (fits v5e's 16 MiB default scoped VMEM).
        bm = min(1024, max(16, _round_up(-(-B // 2), 16)))
    bm = max(8, _round_up(bm, 8))
    bm = min(bm, _round_up(B, 8))
    return bm


@functools.partial(jax.jit, static_argnames=("bm",))
def mlps_forward(x, prepared, bm=None):
    """x: (B, 784) preferred (or (B, 1, 28, 28)). Returns (B, 10) f32 logits."""
    w1, b1, w2, b2, w3, b3 = prepared
    if x.ndim != 2:
        # TODO(synk): flatten upstream where possible; NCHW->(B,784) is a relayout copy.
        x = x.reshape(-1, D_IN)
    B = x.shape[0]
    bm = _pick_bm(B, bm)

    grid_spec = pl.GridSpec(
        # Partial last block is fine: junk OOB rows only yield junk logits that
        # Pallas never stores past the (B, D_OUT_P) array bound.
        grid=(pl.cdiv(B, bm),),
        in_specs=[
            pl.BlockSpec((bm, D_IN), lambda i: (i, 0)),         # x tile (streams, f32)
            pl.BlockSpec((D_IN, D_H1), lambda i: (0, 0)),       # w1 (resident)
            pl.BlockSpec((1, D_H1), lambda i: (0, 0)),          # b1
            pl.BlockSpec((D_H1, D_H2_P), lambda i: (0, 0)),     # w2 (padded)
            pl.BlockSpec((1, D_H2_P), lambda i: (0, 0)),        # b2
            pl.BlockSpec((D_H2_P, D_OUT_P), lambda i: (0, 0)),  # w3 (padded)
            pl.BlockSpec((1, D_OUT_P), lambda i: (0, 0)),       # b3
        ],
        out_specs=pl.BlockSpec((bm, D_OUT_P), lambda i: (i, 0)),
    )

    out = pl.pallas_call(
        mlp_kernel,
        out_shape=jax.ShapeDtypeStruct((B, D_OUT_P), jnp.float32),
        grid_spec=grid_spec,
        compiler_params=pltpu.CompilerParams(
            dimension_semantics=("parallel",),  # batch axis: independent tiles
        ),
    )(x, w1, b1, w2, b2, w3, b3)

    return out[:, :D_OUT]


def init_params(key):
    """Deterministic synthetic parameters with nn.Linear-like fan-in scaling."""
    dims = [(D_IN, D_H1), (D_H1, D_H2), (D_H2, D_OUT)]
    keys = jax.random.split(key, 2 * len(dims))
    params = []
    for li, (fan_in, fan_out) in enumerate(dims):
        bound = 1.0 / jnp.sqrt(fan_in)
        w = jax.random.uniform(keys[2 * li], (fan_in, fan_out),
                               minval=-bound, maxval=bound, dtype=jnp.float32)
        b = jax.random.uniform(keys[2 * li + 1], (1, fan_out),
                               minval=-bound, maxval=bound, dtype=jnp.float32)
        params += [w, b]
    return tuple(params)


def reference_forward(x, params):
    w1, b1, w2, b2, w3, b3 = params
    x2d = x.reshape(-1, D_IN)
    h1 = jnp.maximum(x2d @ w1 + b1, 0.0)
    h2 = jnp.maximum(h1 @ w2 + b2, 0.0)
    return h2 @ w3 + b3


if __name__ == "__main__":
    key = jax.random.PRNGKey(0)
    k_param, k_x, k_x2 = jax.random.split(key, 3)

    params = init_params(k_param)

    # Padded / cast weights are built once, outside the per-call hot path.
    prep_f32 = prepare_params(params, compute_dtype=jnp.float32)
    prep_bf16 = prepare_params(params, compute_dtype=jnp.bfloat16)

    # Small MNIST-style NCHW input (matches the module); flatten once here.
    x = jax.random.normal(k_x, (16, 1, 28, 28), dtype=jnp.float32)
    x2d = x.reshape(-1, D_IN)
    ref = reference_forward(x, params)

    # f32 compute path (tight tolerance).
    out = jax.block_until_ready(mlps_forward(x2d, prep_f32))
    assert out.shape == (16, 10)
    assert jnp.allclose(out, ref, atol=1e-4, rtol=1e-4)

    # bf16 compute path (f32 accumulation) -> looser tolerance.
    out_bf16 = jax.block_until_ready(mlps_forward(x2d, prep_bf16))
    assert out_bf16.shape == (16, 10)
    assert jnp.allclose(out_bf16, ref, atol=5e-2, rtol=5e-2)

    # Larger, non-multiple batch: multi-step grid with a partial last block
    # (exercises the no-pad path) using the bf16 weight set.
    xb = jax.random.normal(k_x2, (600, D_IN), dtype=jnp.float32)
    refb = reference_forward(xb, params)
    outb = jax.block_until_ready(mlps_forward(xb, prep_bf16))
    assert outb.shape == (600, 10)
    assert jnp.allclose(outb, refb, atol=5e-2, rtol=5e-2)

    print("KERNEL_OK")
</pallas_src>

<mosaic_0001>
module attributes {stable_mosaic.version = 11 : i64} {
  func.func @mlp_kernel(%arg0: i32, %arg1: memref<16x784xf32, #tpu.memory_space<vmem>>, %arg2: memref<784x128xf32, #tpu.memory_space<vmem>>, %arg3: memref<1x128xf32, #tpu.memory_space<vmem>>, %arg4: memref<128x128xf32, #tpu.memory_space<vmem>>, %arg5: memref<1x128xf32, #tpu.memory_space<vmem>>, %arg6: memref<128x16xf32, #tpu.memory_space<vmem>>, %arg7: memref<1x16xf32, #tpu.memory_space<vmem>>, %arg8: memref<16x16xf32, #tpu.memory_space<vmem>>) attributes {dimension_semantics = [#tpu.dimension_semantics<parallel>], iteration_bounds = array<i64: 1>, scalar_prefetch = 0 : i64, scratch_operands = 0 : i64, tpu.core_type = #tpu.core_type<tc>, window_params = [{transform_indices = @transform_0, window_bounds = array<i64: 16, 784>}, {pipeline_mode = #tpu.pipeline_mode<synchronous>, transform_indices = @transform_1, window_bounds = array<i64: 784, 128>}, {pipeline_mode = #tpu.pipeline_mode<synchronous>, transform_indices = @transform_2, window_bounds = array<i64: 1, 128>}, {pipeline_mode = #tpu.pipeline_mode<synchronous>, transform_indices = @transform_3, window_bounds = array<i64: 128, 128>}, {pipeline_mode = #tpu.pipeline_mode<synchronous>, transform_indices = @transform_4, window_bounds = array<i64: 1, 128>}, {pipeline_mode = #tpu.pipeline_mode<synchronous>, transform_indices = @transform_5, window_bounds = array<i64: 128, 16>}, {pipeline_mode = #tpu.pipeline_mode<synchronous>, transform_indices = @transform_6, window_bounds = array<i64: 1, 16>}, {transform_indices = @transform_7, window_bounds = array<i64: 16, 16>}]} {
    %c0 = arith.constant 0 : index
    %c0_0 = arith.constant 0 : index
    %0 = vector.load %arg1[%c0, %c0_0] : memref<16x784xf32, #tpu.memory_space<vmem>>, vector<16x784xf32>
    %c0_1 = arith.constant 0 : index
    %c0_2 = arith.constant 0 : index
    %1 = vector.load %arg2[%c0_1, %c0_2] : memref<784x128xf32, #tpu.memory_space<vmem>>, vector<784x128xf32>
    %cst = arith.constant dense<0.000000e+00> : vector<16x128xf32>
    %2 = tpu.matmul %0, %1, %cst {dimension_numbers = #tpu.dot_dimension_numbers<[1], [0], [0], [1], [0, 0, 1, 1], [], []>} : vector<16x784xf32>, vector<784x128xf32>, vector<16x128xf32> -> vector<16x128xf32>
    %c0_3 = arith.constant 0 : index
    %c0_4 = arith.constant 0 : index
    %3 = vector.load %arg3[%c0_3, %c0_4] : memref<1x128xf32, #tpu.memory_space<vmem>>, vector<1x128xf32>
    %4 = vector.broadcast %3 : vector<1x128xf32> to vector<16x128xf32>
    %5 = arith.addf %2, %4 : vector<16x128xf32>
    %cst_5 = arith.constant 0.000000e+00 : f32
    %6 = vector.broadcast %cst_5 : f32 to vector<16x128xf32>
    %7 = arith.maximumf %5, %6 : vector<16x128xf32>
    %c0_6 = arith.constant 0 : index
    %c0_7 = arith.constant 0 : index
    %8 = vector.load %arg4[%c0_6, %c0_7] : memref<128x128xf32, #tpu.memory_space<vmem>>, vector<128x128xf32>
    %cst_8 = arith.constant dense<0.000000e+00> : vector<16x128xf32>
    %9 = tpu.matmul %7, %8, %cst_8 {dimension_numbers = #tpu.dot_dimension_numbers<[1], [0], [0], [1], [0, 0, 1, 1], [], []>} : vector<16x128xf32>, vector<128x128xf32>, vector<16x128xf32> -> vector<16x128xf32>
    %c0_9 = arith.constant 0 : index
    %c0_10 = arith.constant 0 : index
    %10 = vector.load %arg5[%c0_9, %c0_10] : memref<1x128xf32, #tpu.memory_space<vmem>>, vector<1x128xf32>
    %11 = vector.broadcast %10 : vector<1x128xf32> to vector<16x128xf32>
    %12 = arith.addf %9, %11 : vector<16x128xf32>
    %cst_11 = arith.constant 0.000000e+00 : f32
    %13 = vector.broadcast %cst_11 : f32 to vector<16x128xf32>
    %14 = arith.maximumf %12, %13 : vector<16x128xf32>
    %c0_12 = arith.constant 0 : index
    %c0_13 = arith.constant 0 : index
    %15 = vector.load %arg6[%c0_12, %c0_13] : memref<128x16xf32, #tpu.memory_space<vmem>>, vector<128x16xf32>
    %cst_14 = arith.constant dense<0.000000e+00> : vector<16x16xf32>
    %16 = tpu.matmul %14, %15, %cst_14 {dimension_numbers = #tpu.dot_dimension_numbers<[1], [0], [0], [1], [0, 0, 1, 1], [], []>} : vector<16x128xf32>, vector<128x16xf32>, vector<16x16xf32> -> vector<16x16xf32>
    %c0_15 = arith.constant 0 : index
    %c0_16 = arith.constant 0 : index
    %17 = vector.load %arg7[%c0_15, %c0_16] : memref<1x16xf32, #tpu.memory_space<vmem>>, vector<1x16xf32>
    %18 = vector.broadcast %17 : vector<1x16xf32> to vector<16x16xf32>
    %19 = arith.addf %16, %18 : vector<16x16xf32>
    %c0_17 = arith.constant 0 : index
    %c0_18 = arith.constant 0 : index
    %20 = vector.load %arg8[%c0_17, %c0_18] : memref<16x16xf32, #tpu.memory_space<vmem>>, vector<16x16xf32>
    tpu.vector_store %arg8[%c0_17, %c0_18], %19 {strides = array<i32>} : memref<16x16xf32, #tpu.memory_space<vmem>>, vector<16x16xf32>,
    return
  }
  func.func @transform_0(%arg0: i32) -> (i32, i32) {
    %c0_i32 = arith.constant 0 : i32
    %c0_i32_0 = arith.constant 0 : i32
    return %arg0, %c0_i32 : i32, i32
  }
  func.func @transform_1(%arg0: i32) -> (i32, i32) {
    %c0_i32 = arith.constant 0 : i32
    %c0_i32_0 = arith.constant 0 : i32
    %c0_i32_1 = arith.constant 0 : i32
    return %c0_i32, %c0_i32_0 : i32, i32
  }
  func.func @transform_2(%arg0: i32) -> (i32, i32) {
    %c0_i32 = arith.constant 0 : i32
    %c0_i32_0 = arith.constant 0 : i32
    %c0_i32_1 = arith.constant 0 : i32
    return %c0_i32, %c0_i32_0 : i32, i32
  }
  func.func @transform_3(%arg0: i32) -> (i32, i32) {
    %c0_i32 = arith.constant 0 : i32
    %c0_i32_0 = arith.constant 0 : i32
    %c0_i32_1 = arith.constant 0 : i32
    return %c0_i32, %c0_i32_0 : i32, i32
  }
  func.func @transform_4(%arg0: i32) -> (i32, i32) {
    %c0_i32 = arith.constant 0 : i32
    %c0_i32_0 = arith.constant 0 : i32
    %c0_i32_1 = arith.constant 0 : i32
    return %c0_i32, %c0_i32_0 : i32, i32
  }
  func.func @transform_5(%arg0: i32) -> (i32, i32) {
    %c0_i32 = arith.constant 0 : i32
    %c0_i32_0 = arith.constant 0 : i32
    %c0_i32_1 = arith.constant 0 : i32
    return %c0_i32, %c0_i32_0 : i32, i32
  }
  func.func @transform_6(%arg0: i32) -> (i32, i32) {
    %c0_i32 = arith.constant 0 : i32
    %c0_i32_0 = arith.constant 0 : i32
    %c0_i32_1 = arith.constant 0 : i32
    return %c0_i32, %c0_i32_0 : i32, i32
  }
  func.func @transform_7(%arg0: i32) -> (i32, i32) {
    %c0_i32 = arith.constant 0 : i32
    %c0_i32_0 = arith.constant 0 : i32
    return %arg0, %c0_i32 : i32, i32
  }
}

</mosaic_0001>

<llo_original>
// kernel: mlps_forward.1
$region0: #{mlps_forward.1}
  #allocation0 [shape = 'u32[]', space=smem, size = 0x4, offset = 0x4, fixed_abs, tag = 'smem constant byte address 0x4 - core index']
  #allocation1 [shape = 'u32[144,128]{1,0:T(1,128)}', space=vmem, size = 0x12000, scoped, tag = 'internal scratch']
  %s0 = inlined_call_operand.hbm [shape: f32[16,784], index: 0, kind: input, shape index: {}]
  %s1 = inlined_call_operand.hbm [shape: f32[784,128], index: 1, kind: input, shape index: {}]
  %s2 = inlined_call_operand.vmem [shape: f32[1,128], index: 2, kind: input, shape index: {}]
  %s3 = inlined_call_operand.vmem [shape: f32[128,128], index: 3, kind: input, shape index: {}]
  %s4 = inlined_call_operand.vmem [shape: f32[1,128], index: 4, kind: input, shape index: {}]
  %s5 = inlined_call_operand.vmem [shape: f32[128,16], index: 5, kind: input, shape index: {}]
  %s6 = inlined_call_operand.vmem [shape: f32[1,16], index: 6, kind: input, shape index: {}]
  %s7 = inlined_call_operand.hbm [shape: f32[16,16], index: 7, kind: output, shape index: {}]
  %s8 = sld [smem:[#allocation0]]
  $region46: #{mlps_forward.1} parent=0
    _
  %s10 = ssub.s32 1, %s8
  %s11 = scalar_select 0, %s10, %s8
  $region1: #{mlps_forward.1} parent=0
    #allocation2 [shape = 'u8[57344]{0}', space=vmem, size = 0xe000, scoped, tag = 'input window, operand 0, single buffered']
    #allocation3 [shape = 's32[1]{0}', space=sflag, size = 0x4, scoped, tag = 'scoped memory for mlps_forward.1']
    #allocation4 [shape = 's32[1]{0}', space=sflag, size = 0x4, scoped, tag = 'scoped memory for mlps_forward.1']
    #allocation5 [shape = 'u8[401408]{0}', space=vmem, size = 0x62000, scoped, tag = 'input window, operand 1, single buffered']
    #allocation6 [shape = 's32[1]{0}', space=sflag, size = 0x4, scoped, tag = 'scoped memory for mlps_forward.1']
    #allocation7 [shape = 'u8[8192]{0}', space=vmem, size = 0x2000, scoped, tag = 'output window, operand 0, single buffered']
    %12 = vsyncpa [#allocation3], 0
    %13 = vsyncpa [#allocation6], 0
    %14 = vsyncpa [#allocation4], 0
    // Predicated region
    $region2: #{mlps_forward.1} parent=1 // pred_check
      _
    $region3: #{mlps_forward.1} parent=1 // pred_check_branch
      %16 = sbr.rel (0) target = $region5
    $region4: #{mlps_forward.1} parent=1 // pred_region
      %s18 = ssub.s32 1792, 1792
      %19 = vsyncadd [#allocation3], %s18
      %s20 = sshll.u32 [#allocation2], 4
      %s21 = int_to_ptr.vmem [resolvable:$true] %s20
      %26 = dma.hbm_to_vmem [thread:$0]  %s0, 1792, %s21, [#allocation3], 896, 896, 56
    $region5: #{mlps_forward.1} parent=1 // pred_fallthru
      _
    // Predicated region
    $region6: #{mlps_forward.1} parent=1 // pred_check
      _
    $region7: #{mlps_forward.1} parent=1 // pred_check_branch
      %28 = sbr.rel (0) target = $region9
    $region8: #{mlps_forward.1} parent=1 // pred_region
      %s30 = ssub.s32 12544, 12544
      %31 = vsyncadd [#allocation6], %s30
      %s32 = sshll.u32 [#allocation5], 4
      %s33 = int_to_ptr.vmem [resolvable:$true] %s32
      %38 = dma.hbm_to_vmem [thread:$0]  %s1, 12544, %s33, [#allocation6], 128, 128, 8
    $region9: #{mlps_forward.1} parent=1 // pred_fallthru
      _
    // Predicated region
    $region10: #{mlps_forward.1} parent=1 // pred_check
      _
    $region11: #{mlps_forward.1} parent=1 // pred_check_branch
      %40 = sbr.rel (0) target = $region13
    $region12: #{mlps_forward.1} parent=1 // pred_region
      _
    $region13: #{mlps_forward.1} parent=1 // pred_fallthru
      _
    // Predicated region
    $region14: #{mlps_forward.1} parent=1 // pred_check
      _
    $region15: #{mlps_forward.1} parent=1 // pred_check_branch
      %42 = sbr.rel (0) target = $region17
    $region16: #{mlps_forward.1} parent=1 // pred_region
      _
    $region17: #{mlps_forward.1} parent=1 // pred_fallthru
      _
    // Predicated region
    $region18: #{mlps_forward.1} parent=1 // pred_check
      _
    $region19: #{mlps_forward.1} parent=1 // pred_check_branch
      %44 = sbr.rel (0) target = $region21
    $region20: #{mlps_forward.1} parent=1 // pred_region
      _
    $region21: #{mlps_forward.1} parent=1 // pred_fallthru
      _
    // Predicated region
    $region22: #{mlps_forward.1} parent=1 // pred_check
      _
    $region23: #{mlps_forward.1} parent=1 // pred_check_branch
      %46 = sbr.rel (0) target = $region25
    $region24: #{mlps_forward.1} parent=1 // pred_region
      _
    $region25: #{mlps_forward.1} parent=1 // pred_fallthru
      _
    // Predicated region
    $region26: #{mlps_forward.1} parent=1 // pred_check
      _
    $region27: #{mlps_forward.1} parent=1 // pred_check_branch
      %48 = sbr.rel (0) target = $region29
    $region28: #{mlps_forward.1} parent=1 // pred_region
      _
    $region29: #{mlps_forward.1} parent=1 // pred_fallthru
      _
    // Predicated region
    $region30: #{mlps_forward.1} parent=1 // pred_check
      _
    $region31: #{mlps_forward.1} parent=1 // pred_check_branch
      %50 = sbr.rel (0) target = $region33
    $region32: #{mlps_forward.1} parent=1 // pred_region
      %51 = dma.done [#allocation3], 1792
    $region33: #{mlps_forward.1} parent=1 // pred_fallthru
      _
    // Predicated region
    $region34: #{mlps_forward.1} parent=1 // pred_check
      _
    $region35: #{mlps_forward.1} parent=1 // pred_check_branch
      %53 = sbr.rel (0) target = $region37
    $region36: #{mlps_forward.1} parent=1 // pred_region
      %54 = dma.done [#allocation6], 12544
    $region37: #{mlps_forward.1} parent=1 // pred_fallthru
      _
    %v55 = vld [vmem:[#allocation2] sm:$0xff]
    %v56 = vld [vmem:[#allocation2 + $0x8] sm:$0xff]
    %v57 = vld [vmem:[#allocation2 + $0x10] sm:$0xff]
    %v58 = vld [vmem:[#allocation2 + $0x18] sm:$0xff]
    %v59 = vld [vmem:[#allocation2 + $0x20] sm:$0xff]
    %v60 = vld [vmem:[#allocation2 + $0x28] sm:$0xff]
    %v61 = vld [vmem:[#allocation2 + $0x30] sm:$0xff]
    %v62 = vld [vmem:[#allocation2 + $0x38] sm:$0xff]
    %v63 = vld [vmem:[#allocation2 + $0x40] sm:$0xff]
    %v64 = vld [vmem:[#allocation2 + $0x48] sm:$0xff]
    %v65 = vld [vmem:[#allocation2 + $0x50] sm:$0xff]
    %v66 = vld [vmem:[#allocation2 + $0x58] sm:$0xff]
    %v67 = vld [vmem:[#allocation2 + $0x60] sm:$0xff]
    %v68 = vld [vmem:[#allocation2 + $0x68] sm:$0xff]
    %v69 = vld [vmem:[#allocation5] sm:$0xff]
    %v70 = vld [vmem:[#allocation5 + $0x8] sm:$0xff]
    %v71 = vld [vmem:[#allocation5 + $0x10] sm:$0xff]
    %v72 = vld [vmem:[#allocation5 + $0x18] sm:$0xff]
    %v73 = vld [vmem:[#allocation5 + $0x20] sm:$0xff]
    %v74 = vld [vmem:[#allocation5 + $0x28] sm:$0xff]
    %v75 = vld [vmem:[#allocation5 + $0x30] sm:$0xff]
    %v76 = vld [vmem:[#allocation5 + $0x38] sm:$0xff]
    %v77 = vld [vmem:[#allocation5 + $0x40] sm:$0xff]
    %v78 = vld [vmem:[#allocation5 + $0x48] sm:$0xff]
    %v79 = vld [vmem:[#allocation5 + $0x50] sm:$0xff]
    %v80 = vld [vmem:[#allocation5 + $0x58] sm:$0xff]
    %v81 = vld [vmem:[#allocation5 + $0x60] sm:$0xff]
    %v82 = vld [vmem:[#allocation5 + $0x68] sm:$0xff]
    %v83 = vld [vmem:[#allocation5 + $0x70] sm:$0xff]
    %v84 = vld [vmem:[#allocation5 + $0x78] sm:$0xff]
    %v85 = vld [vmem:[#allocation5 + $0x80] sm:$0xff]
    %v86 = vld [vmem:[#allocation5 + $0x88] sm:$0xff]
    %v87 = vld [vmem:[#allocation5 + $0x90] sm:$0xff]
    %v88 = vld [vmem:[#allocation5 + $0x98] sm:$0xff]
    %v89 = vld [vmem:[#allocation5 + $0xa0] sm:$0xff]
    %v90 = vld [vmem:[#allocation5 + $0xa8] sm:$0xff]
    %v91 = vld [vmem:[#allocation5 + $0xb0] sm:$0xff]
    %v92 = vld [vmem:[#allocation5 + $0xb8] sm:$0xff]
    %v93 = vld [vmem:[#allocation5 + $0xc0] sm:$0xff]
    %v94 = vld [vmem:[#allocation5 + $0xc8] sm:$0xff]
    %v95 = vld [vmem:[#allocation5 + $0xd0] sm:$0xff]
    %v96 = vld [vmem:[#allocation5 + $0xd8] sm:$0xff]
    %v97 = vld [vmem:[#allocation5 + $0xe0] sm:$0xff]
    %v98 = vld [vmem:[#allocation5 + $0xe8] sm:$0xff]
    %v99 = vld [vmem:[#allocation5 + $0xf0] sm:$0xff]
    %v100 = vld [vmem:[#allocation5 + $0xf8] sm:$0xff]
    %v101 = vld [vmem:[#allocation5 + $0x100] sm:$0xff]
    %v102 = vld [vmem:[#allocation5 + $0x108] sm:$0xff]
    %v103 = vld [vmem:[#allocation5 + $0x110] sm:$0xff]
    %v104 = vld [vmem:[#allocation5 + $0x118] sm:$0xff]
    %v105 = vld [vmem:[#allocation5 + $0x120] sm:$0xff]
    %v106 = vld [vmem:[#allocation5 + $0x128] sm:$0xff]
    %v107 = vld [vmem:[#allocation5 + $0x130] sm:$0xff]
    %v108 = vld [vmem:[#allocation5 + $0x138] sm:$0xff]
    %v109 = vld [vmem:[#allocation5 + $0x140] sm:$0xff]
    %v110 = vld [vmem:[#allocation5 + $0x148] sm:$0xff]
    %v111 = vld [vmem:[#allocation5 + $0x150] sm:$0xff]
    %v112 = vld [vmem:[#allocation5 + $0x158] sm:$0xff]
    %v113 = vld [vmem:[#allocation5 + $0x160] sm:$0xff]
    %v114 = vld [vmem:[#allocation5 + $0x168] sm:$0xff]
    %v115 = vld [vmem:[#allocation5 + $0x170] sm:$0xff]
    %v116 = vld [vmem:[#allocation5 + $0x178] sm:$0xff]
    %v117 = vld [vmem:[#allocation5 + $0x180] sm:$0xff]
    %v118 = vld [vmem:[#allocation5 + $0x188] sm:$0xff]
    %v119 = vld [vmem:[#allocation5 + $0x190] sm:$0xff]
    %v120 = vld [vmem:[#allocation5 + $0x198] sm:$0xff]
    %v121 = vld [vmem:[#allocation5 + $0x1a0] sm:$0xff]
    %v122 = vld [vmem:[#allocation5 + $0x1a8] sm:$0xff]
    %v123 = vld [vmem:[#allocation5 + $0x1b0] sm:$0xff]
    %v124 = vld [vmem:[#allocation5 + $0x1b8] sm:$0xff]
    %v125 = vld [vmem:[#allocation5 + $0x1c0] sm:$0xff]
    %v126 = vld [vmem:[#allocation5 + $0x1c8] sm:$0xff]
    %v127 = vld [vmem:[#allocation5 + $0x1d0] sm:$0xff]
    %v128 = vld [vmem:[#allocation5 + $0x1d8] sm:$0xff]
    %v129 = vld [vmem:[#allocation5 + $0x1e0] sm:$0xff]
    %v130 = vld [vmem:[#allocation5 + $0x1e8] sm:$0xff]
    %v131 = vld [vmem:[#allocation5 + $0x1f0] sm:$0xff]
    %v132 = vld [vmem:[#allocation5 + $0x1f8] sm:$0xff]
    %v133 = vld [vmem:[#allocation5 + $0x200] sm:$0xff]
    %v134 = vld [vmem:[#allocation5 + $0x208] sm:$0xff]
    %v135 = vld [vmem:[#allocation5 + $0x210] sm:$0xff]
    %v136 = vld [vmem:[#allocation5 + $0x218] sm:$0xff]
    %v137 = vld [vmem:[#allocation5 + $0x220] sm:$0xff]
    %v138 = vld [vmem:[#allocation5 + $0x228] sm:$0xff]
    %v139 = vld [vmem:[#allocation5 + $0x230] sm:$0xff]
    %v140 = vld [vmem:[#allocation5 + $0x238] sm:$0xff]
    %v141 = vld [vmem:[#allocation5 + $0x240] sm:$0xff]
    %v142 = vld [vmem:[#allocation5 + $0x248] sm:$0xff]
    %v143 = vld [vmem:[#allocation5 + $0x250] sm:$0xff]
    %v144 = vld [vmem:[#allocation5 + $0x258] sm:$0xff]
    %v145 = vld [vmem:[#allocation5 + $0x260] sm:$0xff]
    %v146 = vld [vmem:[#allocation5 + $0x268] sm:$0xff]
    %v147 = vld [vmem:[#allocation5 + $0x270] sm:$0xff]
    %v148 = vld [vmem:[#allocation5 + $0x278] sm:$0xff]
    %v149 = vld [vmem:[#allocation5 + $0x280] sm:$0xff]
    %v150 = vld [vmem:[#allocation5 + $0x288] sm:$0xff]
    %v151 = vld [vmem:[#allocation5 + $0x290] sm:$0xff]
    %v152 = vld [vmem:[#allocation5 + $0x298] sm:$0xff]
    %v153 = vld [vmem:[#allocation5 + $0x2a0] sm:$0xff]
    %v154 = vld [vmem:[#allocation5 + $0x2a8] sm:$0xff]
    %v155 = vld [vmem:[#allocation5 + $0x2b0] sm:$0xff]
    %v156 = vld [vmem:[#allocation5 + $0x2b8] sm:$0xff]
    %v157 = vld [vmem:[#allocation5 + $0x2c0] sm:$0xff]
    %v158 = vld [vmem:[#allocation5 + $0x2c8] sm:$0xff]
    %v159 = vld [vmem:[#allocation5 + $0x2d0] sm:$0xff]
    %v160 = vld [vmem:[#allocation5 + $0x2d8] sm:$0xff]
    %v161 = vld [vmem:[#allocation5 + $0x2e0] sm:$0xff]
    %v162 = vld [vmem:[#allocation5 + $0x2e8] sm:$0xff]
    %v163 = vld [vmem:[#allocation5 + $0x2f0] sm:$0xff]
    %v164 = vld [vmem:[#allocation5 + $0x2f8] sm:$0xff]
    %v165 = vld [vmem:[#allocation5 + $0x300] sm:$0xff]
    %v166 = vld [vmem:[#allocation5 + $0x308] sm:$0xff]
    %v167 = vld [vmem:[%s2] sm:$0x1]
    %v169 = vlaneseq
    %v170 = vshrl.u32 %v169, 7
    %v171 = vsub.s32 0, %v170
    %v172 = vrot.slane %v167, %v171
    %vm174 = vcmask 130048
    %v176 = vsel %vm174, %v61, 0
    %v179 = vsel %vm174, %v68, 0
    %181 = vmatprep.subr.mxu0 0.0
    %182 = vmatpush1.msra.mxu0 %v69
    %183 = vmatprep.subr.mxu0 0.0
    %184 = vmatpush1.msra.mxu0 %v70
    %185 = vmatprep.subr.mxu0 0.0
    %186 = vmatpush1.msra.mxu0 %v71
    %187 = vmatprep.subr.mxu0 0.0
    %188 = vmatpush1.msra.mxu0 %v72
    %189 = vmatprep.subr.mxu0 0.0
    %190 = vmatpush1.msra.mxu0 %v73
    %191 = vmatprep.subr.mxu0 0.0
    %192 = vmatpush1.msra.mxu0 %v74
    %193 = vmatprep.subr.mxu0 0.0
    %194 = vmatpush1.msra.mxu0 %v75
    %195 = vmatprep.subr.mxu0 0.0
    %196 = vmatpush1.msra.mxu0 %v76
    %197 = vmatprep.subr.mxu0 0.0
    %198 = vmatpush1.msra.mxu0 %v77
    %199 = vmatprep.subr.mxu0 0.0
    %200 = vmatpush1.msra.mxu0 %v78
    %201 = vmatprep.subr.mxu0 0.0
    %202 = vmatpush1.msra.mxu0 %v79
    %203 = vmatprep.subr.mxu0 0.0
    %204 = vmatpush1.msra.mxu0 %v80
    %205 = vmatprep.subr.mxu0 0.0
    %206 = vmatpush1.msra.mxu0 %v81
    %207 = vmatprep.subr.mxu0 0.0
    %208 = vmatpush1.msra.mxu0 %v82
    %209 = vmatprep.subr.mxu0 0.0
    %210 = vmatpush1.msra.mxu0 %v83
    %211 = vmatprep.subr.mxu0 0.0
    %212 = vmatpush1.msra.mxu0 %v84
    %213 = vmatprep.subr.mxu0 0.0
    %214 = vmatpush1.msra.mxu0 %v85
    %215 = vmatprep.subr.mxu0 0.0
    %216 = vmatpush1.msra.mxu0 %v86
    %217 = vmatprep.subr.mxu0 0.0
    %218 = vmatpush1.msra.mxu0 %v87
    %219 = vmatprep.subr.mxu0 0.0
    %220 = vmatpush1.msra.mxu0 %v88
    %221 = vmatprep.subr.mxu0 0.0
    %222 = vmatpush1.msra.mxu0 %v89
    %223 = vmatprep.subr.mxu0 0.0
    %224 = vmatpush1.msra.mxu0 %v90
    %225 = vmatprep.subr.mxu0 0.0
    %226 = vmatpush1.msra.mxu0 %v91
    %227 = vmatprep.subr.mxu0 0.0
    %228 = vmatpush1.msra.mxu0 %v92
    %229 = vmatprep.subr.mxu0 0.0
    %230 = vmatpush1.msra.mxu0 %v93
    %231 = vmatprep.subr.mxu0 0.0
    %232 = vmatpush1.msra.mxu0 %v94
    %233 = vmatprep.subr.mxu0 0.0
    %234 = vmatpush1.msra.mxu0 %v95
    %235 = vmatprep.subr.mxu0 0.0
    %236 = vmatpush1.msra.mxu0 %v96
    %237 = vmatprep.subr.mxu0 0.0
    %238 = vmatpush1.msra.mxu0 %v97
    %239 = vmatprep.subr.mxu0 0.0
    %240 = vmatpush1.msra.mxu0 %v98
    %241 = vmatprep.subr.mxu0 0.0
    %242 = vmatpush1.msra.mxu0 %v99
    %243 = vmatprep.subr.mxu0 0.0
    %244 = vmatpush1.msra.mxu0 %v100
    %245 = vmatprep.mubr.f32.mxu0 %v56
    %246 = vmatmul.mubr.f32.gmra.mrb[0].mxu0 %v55
    %v247 = vpop.f32.mrb[0].mxu0
    %v248 = vadd.f32 %v172, %v247
    %v249 = vpop.f32.mrb[0].mxu0
    %250 = vmatprep.mubr.f32.mxu0 %v63
    %251 = vmatmul.mubr.f32.gmra.mrb[0].mxu0 %v62
    %v252 = vpop.f32.mrb[0].mxu0
    %v253 = vadd.f32 %v172, %v252
    %v254 = vpop.f32.mrb[0].mxu0
    %255 = vdwg.mxu0
    %256 = vmatprep.subr.mxu0 0.0
    %257 = vmatpush1.msra.mxu0 %v101
    %258 = vmatprep.subr.mxu0 0.0
    %259 = vmatpush1.msra.mxu0 %v102
    %260 = vmatprep.subr.mxu0 0.0
    %261 = vmatpush1.msra.mxu0 %v103
    %262 = vmatprep.subr.mxu0 0.0
    %263 = vmatpush1.msra.mxu0 %v104
    %264 = vmatprep.subr.mxu0 0.0
    %265 = vmatpush1.msra.mxu0 %v105
    %266 = vmatprep.subr.mxu0 0.0
    %267 = vmatpush1.msra.mxu0 %v106
    %268 = vmatprep.subr.mxu0 0.0
    %269 = vmatpush1.msra.mxu0 %v107
    %270 = vmatprep.subr.mxu0 0.0
    %271 = vmatpush1.msra.mxu0 %v108
    %272 = vmatprep.subr.mxu0 0.0
    %273 = vmatpush1.msra.mxu0 %v109
    %274 = vmatprep.subr.mxu0 0.0
    %275 = vmatpush1.msra.mxu0 %v110
    %276 = vmatprep.subr.mxu0 0.0
    %277 = vmatpush1.msra.mxu0 %v111
    %278 = vmatprep.subr.mxu0 0.0
    %279 = vmatpush1.msra.mxu0 %v112
    %280 = vmatprep.subr.mxu0 0.0
    %281 = vmatpush1.msra.mxu0 %v113
    %282 = vmatprep.subr.mxu0 0.0
    %283 = vmatpush1.msra.mxu0 %v114
    %284 = vmatprep.subr.mxu0 0.0
    %285 = vmatpush1.msra.mxu0 %v115
    %286 = vmatprep.subr.mxu0 0.0
    %287 = vmatpush1.msra.mxu0 %v116
    %288 = vmatprep.subr.mxu0 0.0
    %289 = vmatpush1.msra.mxu0 %v117
    %290 = vmatprep.subr.mxu0 0.0
    %291 = vmatpush1.msra.mxu0 %v118
    %292 = vmatprep.subr.mxu0 0.0
    %293 = vmatpush1.msra.mxu0 %v119
    %294 = vmatprep.subr.mxu0 0.0
    %295 = vmatpush1.msra.mxu0 %v120
    %296 = vmatprep.subr.mxu0 0.0
    %297 = vmatpush1.msra.mxu0 %v121
    %298 = vmatprep.subr.mxu0 0.0
    %299 = vmatpush1.msra.mxu0 %v122
    %300 = vmatprep.subr.mxu0 0.0
    %301 = vmatpush1.msra.mxu0 %v123
    %302 = vmatprep.subr.mxu0 0.0
    %303 = vmatpush1.msra.mxu0 %v124
    %304 = vmatprep.subr.mxu0 0.0
    %305 = vmatpush1.msra.mxu0 %v125
    %306 = vmatprep.subr.mxu0 0.0
    %307 = vmatpush1.msra.mxu0 %v126
    %308 = vmatprep.subr.mxu0 0.0
    %309 = vmatpush1.msra.mxu0 %v127
    %310 = vmatprep.subr.mxu0 0.0
    %311 = vmatpush1.msra.mxu0 %v128
    %312 = vmatprep.subr.mxu0 0.0
    %313 = vmatpush1.msra.mxu0 %v129
    %314 = vmatprep.subr.mxu0 0.0
    %315 = vmatpush1.msra.mxu0 %v130
    %316 = vmatprep.subr.mxu0 0.0
    %317 = vmatpush1.msra.mxu0 %v131
    %318 = vmatprep.subr.mxu0 0.0
    %319 = vmatpush1.msra.mxu0 %v132
    %320 = vmatprep.mubr.f32.mxu0 %v58
    %321 = vmatmul.mubr.f32.gmra.mrb[0].mxu0 %v57
    %v322 = vpop.f32.mrb[0].mxu0
    %v323 = vadd.f32 %v248, %v322
    %v324 = vpop.f32.mrb[0].mxu0
    %325 = vmatprep.mubr.f32.mxu0 %v65
    %326 = vmatmul.mubr.f32.gmra.mrb[0].mxu0 %v64
    %v327 = vpop.f32.mrb[0].mxu0
    %v328 = vadd.f32 %v253, %v327
    %v329 = vpop.f32.mrb[0].mxu0
    %330 = vdwg.mxu0
    %331 = vmatprep.subr.mxu0 0.0
    %332 = vmatpush1.msra.mxu0 %v133
    %333 = vmatprep.subr.mxu0 0.0
    %334 = vmatpush1.msra.mxu0 %v134
    %335 = vmatprep.subr.mxu0 0.0
    %336 = vmatpush1.msra.mxu0 %v135
    %337 = vmatprep.subr.mxu0 0.0
    %338 = vmatpush1.msra.mxu0 %v136
    %339 = vmatprep.subr.mxu0 0.0
    %340 = vmatpush1.msra.mxu0 %v137
    %341 = vmatprep.subr.mxu0 0.0
    %342 = vmatpush1.msra.mxu0 %v138
    %343 = vmatprep.subr.mxu0 0.0
    %344 = vmatpush1.msra.mxu0 %v139
    %345 = vmatprep.subr.mxu0 0.0
    %346 = vmatpush1.msra.mxu0 %v140
    %347 = vmatprep.subr.mxu0 0.0
    %348 = vmatpush1.msra.mxu0 %v141
    %349 = vmatprep.subr.mxu0 0.0
    %350 = vmatpush1.msra.mxu0 %v142
    %351 = vmatprep.subr.mxu0 0.0
    %352 = vmatpush1.msra.mxu0 %v143
    %353 = vmatprep.subr.mxu0 0.0
    %354 = vmatpush1.msra.mxu0 %v144
    %355 = vmatprep.subr.mxu0 0.0
    %356 = vmatpush1.msra.mxu0 %v145
    %357 = vmatprep.subr.mxu0 0.0
    %358 = vmatpush1.msra.mxu0 %v146
    %359 = vmatprep.subr.mxu0 0.0
    %360 = vmatpush1.msra.mxu0 %v147
    %361 = vmatprep.subr.mxu0 0.0
    %362 = vmatpush1.msra.mxu0 %v148
    %363 = vmatprep.subr.mxu0 0.0
    %364 = vmatpush1.msra.mxu0 %v149
    %365 = vmatprep.subr.mxu0 0.0
    %366 = vmatpush1.msra.mxu0 %v150
    %367 = vmatprep.subr.mxu0 0.0
    %368 = vmatpush1.msra.mxu0 %v151
    %369 = vmatprep.subr.mxu0 0.0
    %370 = vmatpush1.msra.mxu0 %v152
    %371 = vmatprep.subr.mxu0 0.0
    %372 = vmatpush1.msra.mxu0 %v153
    %373 = vmatprep.subr.mxu0 0.0
    %374 = vmatpush1.msra.mxu0 %v154
    %375 = vmatprep.subr.mxu0 0.0
    %376 = vmatpush1.msra.mxu0 %v155
    %377 = vmatprep.subr.mxu0 0.0
    %378 = vmatpush1.msra.mxu0 %v156
    %379 = vmatprep.subr.mxu0 0.0
    %380 = vmatpush1.msra.mxu0 %v157
    %381 = vmatprep.subr.mxu0 0.0
    %382 = vmatpush1.msra.mxu0 %v158
    %383 = vmatprep.subr.mxu0 0.0
    %384 = vmatpush1.msra.mxu0 %v159
    %385 = vmatprep.subr.mxu0 0.0
    %386 = vmatpush1.msra.mxu0 %v160
    %387 = vmatprep.subr.mxu0 0.0
    %388 = vmatpush1.msra.mxu0 %v161
    %389 = vmatprep.subr.mxu0 0.0
    %390 = vmatpush1.msra.mxu0 %v162
    %391 = vmatprep.subr.mxu0 0.0
    %392 = vmatpush1.msra.mxu0 %v163
    %393 = vmatprep.subr.mxu0 0.0
    %394 = vmatpush1.msra.mxu0 %v164
    %395 = vmatprep.mubr.f32.mxu0 %v60
    %396 = vmatmul.mubr.f32.gmra.mrb[0].mxu0 %v59
    %v397 = vpop.f32.mrb[0].mxu0
    %v398 = vadd.f32 %v323, %v397
    %v399 = vpop.f32.mrb[0].mxu0
    %400 = vmatprep.mubr.f32.mxu0 %v67
    %401 = vmatmul.mubr.f32.gmra.mrb[0].mxu0 %v66
    %v402 = vpop.f32.mrb[0].mxu0
    %v403 = vadd.f32 %v328, %v402
    %v404 = vpop.f32.mrb[0].mxu0
    %405 = vdwg.mxu0
    %406 = vmatprep.subr.mxu0 0.0
    %407 = vmatpush1.msra.mxu0 %v165
    %408 = vmatprep.subr.mxu0 0.0
    %409 = vmatpush1.msra.mxu0 %v166
    %410 = vmatprep.subr.mxu0 0.0
    %411 = vmatpush1.msra.mxu0 0.0
    %412 = vmatprep.subr.mxu0 0.0
    %413 = vmatpush1.msra.mxu0 0.0
    %414 = vmatprep.subr.mxu0 0.0
    %415 = vmatpush1.msra.mxu0 0.0
    %416 = vmatprep.subr.mxu0 0.0
    %417 = vmatpush1.msra.mxu0 0.0
    %418 = vmatprep.subr.mxu0 0.0
    %419 = vmatpush1.msra.mxu0 0.0
    %420 = vmatprep.subr.mxu0 0.0
    %421 = vmatpush1.msra.mxu0 0.0
    %422 = vmatprep.subr.mxu0 0.0
    %423 = vmatpush1.msra.mxu0 0.0
    %424 = vmatprep.subr.mxu0 0.0
    %425 = vmatpush1.msra.mxu0 0.0
    %426 = vmatprep.subr.mxu0 0.0
    %427 = vmatpush1.msra.mxu0 0.0
    %428 = vmatprep.subr.mxu0 0.0
    %429 = vmatpush1.msra.mxu0 0.0
    %430 = vmatprep.subr.mxu0 0.0
    %431 = vmatpush1.msra.mxu0 0.0
    %432 = vmatprep.subr.mxu0 0.0
    %433 = vmatpush1.msra.mxu0 0.0
    %434 = vmatprep.subr.mxu0 0.0
    %435 = vmatpush1.msra.mxu0 0.0
    %436 = vmatprep.subr.mxu0 0.0
    %437 = vmatpush1.msra.mxu0 0.0
    %438 = vmatprep.subr.mxu0 0.0
    %439 = vmatpush1.msra.mxu0 0.0
    %440 = vmatprep.subr.mxu0 0.0
    %441 = vmatpush1.msra.mxu0 0.0
    %442 = vmatprep.subr.mxu0 0.0
    %443 = vmatpush1.msra.mxu0 0.0
    %444 = vmatprep.subr.mxu0 0.0
    %445 = vmatpush1.msra.mxu0 0.0
    %446 = vmatprep.subr.mxu0 0.0
    %447 = vmatpush1.msra.mxu0 0.0
    %448 = vmatprep.subr.mxu0 0.0
    %449 = vmatpush1.msra.mxu0 0.0
    %450 = vmatprep.subr.mxu0 0.0
    %451 = vmatpush1.msra.mxu0 0.0
    %452 = vmatprep.subr.mxu0 0.0
    %453 = vmatpush1.msra.mxu0 0.0
    %454 = vmatprep.subr.mxu0 0.0
    %455 = vmatpush1.msra.mxu0 0.0
    %456 = vmatprep.subr.mxu0 0.0
    %457 = vmatpush1.msra.mxu0 0.0
    %458 = vmatprep.subr.mxu0 0.0
    %459 = vmatpush1.msra.mxu0 0.0
    %460 = vmatprep.subr.mxu0 0.0
    %461 = vmatpush1.msra.mxu0 0.0
    %462 = vmatprep.subr.mxu0 0.0
    %463 = vmatpush1.msra.mxu0 0.0
    %464 = vmatprep.subr.mxu0 0.0
    %465 = vmatpush1.msra.mxu0 0.0
    %466 = vmatprep.subr.mxu0 0.0
    %467 = vmatpush1.msra.mxu0 0.0
    %468 = vmatprep.subr.mxu0 0.0
    %469 = vmatpush1.msra.mxu0 0.0
    %470 = vmatprep.mubr.f32.mxu0 0.0
    %471 = vmatmul.mubr.f32.gmra.mrb[0].mxu0 %v176
    %v472 = vpop.f32.mrb[0].mxu0
    %v473 = vadd.f32 %v398, %v472
    %v474 = vpop.f32.mrb[0].mxu0
    %475 = vmatprep.mubr.f32.mxu0 0.0
    %476 = vmatmul.mubr.f32.gmra.mrb[0].mxu0 %v179
    %v477 = vpop.f32.mrb[0].mxu0
    %v478 = vadd.f32 %v403, %v477
    %v479 = vpop.f32.mrb[0].mxu0
    %480 = vdwg.mxu0
    %v481 = vmax.f32 %v473, 0.0
    %v482 = vmax.f32 %v478, 0.0
    %v483 = vld [vmem:[%s3] sm:$0xff]
    %v484 = vld [vmem:[%s3 + $0x8] sm:$0xff]
    %v485 = vld [vmem:[%s3 + $0x10] sm:$0xff]
    %v486 = vld [vmem:[%s3 + $0x18] sm:$0xff]
    %v487 = vld [vmem:[%s3 + $0x20] sm:$0xff]
    %v488 = vld [vmem:[%s3 + $0x28] sm:$0xff]
    %v489 = vld [vmem:[%s3 + $0x30] sm:$0xff]
    %v490 = vld [vmem:[%s3 + $0x38] sm:$0xff]
    %v491 = vld [vmem:[%s3 + $0x40] sm:$0xff]
    %v492 = vld [vmem:[%s3 + $0x48] sm:$0xff]
    %v493 = vld [vmem:[%s3 + $0x50] sm:$0xff]
    %v494 = vld [vmem:[%s3 + $0x58] sm:$0xff]
    %v495 = vld [vmem:[%s3 + $0x60] sm:$0xff]
    %v496 = vld [vmem:[%s3 + $0x68] sm:$0xff]
    %v497 = vld [vmem:[%s3 + $0x70] sm:$0xff]
    %v498 = vld [vmem:[%s3 + $0x78] sm:$0xff]
    %v499 = vld [vmem:[%s4] sm:$0x1]
    %v501 = vlaneseq
    %v502 = vshrl.u32 %v501, 7
    %v503 = vsub.s32 0, %v502
    %v504 = vrot.slane %v499, %v503
    %506 = vmatprep.subr.mxu0 0.0
    %507 = vmatpush1.msra.mxu0 %v483
    %508 = vmatprep.subr.mxu0 0.0
    %509 = vmatpush1.msra.mxu0 %v484
    %510 = vmatprep.subr.mxu0 0.0
    %511 = vmatpush1.msra.mxu0 %v485
    %512 = vmatprep.subr.mxu0 0.0
    %513 = vmatpush1.msra.mxu0 %v486
    %514 = vmatprep.subr.mxu0 0.0
    %515 = vmatpush1.msra.mxu0 %v487
    %516 = vmatprep.subr.mxu0 0.0
    %517 = vmatpush1.msra.mxu0 %v488
    %518 = vmatprep.subr.mxu0 0.0
    %519 = vmatpush1.msra.mxu0 %v489
    %520 = vmatprep.subr.mxu0 0.0
    %521 = vmatpush1.msra.mxu0 %v490
    %522 = vmatprep.subr.mxu0 0.0
    %523 = vmatpush1.msra.mxu0 %v491
    %524 = vmatprep.subr.mxu0 0.0
    %525 = vmatpush1.msra.mxu0 %v492
    %526 = vmatprep.subr.mxu0 0.0
    %527 = vmatpush1.msra.mxu0 %v493
    %528 = vmatprep.subr.mxu0 0.0
    %529 = vmatpush1.msra.mxu0 %v494
    %530 = vmatprep.subr.mxu0 0.0
    %531 = vmatpush1.msra.mxu0 %v495
    %532 = vmatprep.subr.mxu0 0.0
    %533 = vmatpush1.msra.mxu0 %v496
    %534 = vmatprep.subr.mxu0 0.0
    %535 = vmatpush1.msra.mxu0 %v497
    %536 = vmatprep.subr.mxu0 0.0
    %537 = vmatpush1.msra.mxu0 %v498
    %538 = vmatprep.subr.mxu0 0.0
    %539 = vmatpush1.msra.mxu0 0.0
    %540 = vmatprep.subr.mxu0 0.0
    %541 = vmatpush1.msra.mxu0 0.0
    %542 = vmatprep.subr.mxu0 0.0
    %543 = vmatpush1.msra.mxu0 0.0
    %544 = vmatprep.subr.mxu0 0.0
    %545 = vmatpush1.msra.mxu0 0.0
    %546 = vmatprep.subr.mxu0 0.0
    %547 = vmatpush1.msra.mxu0 0.0
    %548 = vmatprep.subr.mxu0 0.0
    %549 = vmatpush1.msra.mxu0 0.0
    %550 = vmatprep.subr.mxu0 0.0
    %551 = vmatpush1.msra.mxu0 0.0
    %552 = vmatprep.subr.mxu0 0.0
    %553 = vmatpush1.msra.mxu0 0.0
    %554 = vmatprep.subr.mxu0 0.0
    %555 = vmatpush1.msra.mxu0 0.0
    %556 = vmatprep.subr.mxu0 0.0
    %557 = vmatpush1.msra.mxu0 0.0
    %558 = vmatprep.subr.mxu0 0.0
    %559 = vmatpush1.msra.mxu0 0.0
    %560 = vmatprep.subr.mxu0 0.0
    %561 = vmatpush1.msra.mxu0 0.0
    %562 = vmatprep.subr.mxu0 0.0
    %563 = vmatpush1.msra.mxu0 0.0
    %564 = vmatprep.subr.mxu0 0.0
    %565 = vmatpush1.msra.mxu0 0.0
    %566 = vmatprep.subr.mxu0 0.0
    %567 = vmatpush1.msra.mxu0 0.0
    %568 = vmatprep.subr.mxu0 0.0
    %569 = vmatpush1.msra.mxu0 0.0
    %570 = vmatprep.mubr.f32.mxu0 0.0
    %571 = vmatmul.mubr.f32.gmra.mrb[0].mxu0 %v481
    %v572 = vpop.f32.mrb[0].mxu0
    %v573 = vadd.f32 %v504, %v572
    %v574 = vpop.f32.mrb[0].mxu0
    %575 = vmatprep.mubr.f32.mxu0 0.0
    %576 = vmatmul.mubr.f32.gmra.mrb[0].mxu0 %v482
    %v577 = vpop.f32.mrb[0].mxu0
    %v578 = vadd.f32 %v504, %v577
    %v579 = vpop.f32.mrb[0].mxu0
    %580 = vdwg.mxu0
    %v581 = vmax.f32 %v573, 0.0
    %v582 = vmax.f32 %v578, 0.0
    %v583 = vld [vmem:[%s5] sm:$0xff]
    %v584 = vld [vmem:[%s5 + $0x8] sm:$0xff]
    %v585 = vld [vmem:[%s5 + $0x10] sm:$0xff]
    %v586 = vld [vmem:[%s5 + $0x18] sm:$0xff]
    %v587 = vld [vmem:[%s5 + $0x20] sm:$0xff]
    %v588 = vld [vmem:[%s5 + $0x28] sm:$0xff]
    %v589 = vld [vmem:[%s5 + $0x30] sm:$0xff]
    %v590 = vld [vmem:[%s5 + $0x38] sm:$0xff]
    %v591 = vld [vmem:[%s5 + $0x40] sm:$0xff]
    %v592 = vld [vmem:[%s5 + $0x48] sm:$0xff]
    %v593 = vld [vmem:[%s5 + $0x50] sm:$0xff]
    %v594 = vld [vmem:[%s5 + $0x58] sm:$0xff]
    %v595 = vld [vmem:[%s5 + $0x60] sm:$0xff]
    %v596 = vld [vmem:[%s5 + $0x68] sm:$0xff]
    %v597 = vld [vmem:[%s5 + $0x70] sm:$0xff]
    %v598 = vld [vmem:[%s5 + $0x78] sm:$0xff]
    %v599 = vld [vmem:[%s6] sm:$0x1]
    %v601 = vlaneseq
    %v602 = vshrl.u32 %v601, 7
    %v603 = vsub.s32 0, %v602
    %v604 = vrot.slane %v599, %v603
    %606 = vmatprep.subr.mxu0 0.0
    %607 = vmatpush1.msra.mxu0 %v583
    %608 = vmatprep.subr.mxu0 0.0
    %609 = vmatpush1.msra.mxu0 %v584
    %610 = vmatprep.subr.mxu0 0.0
    %611 = vmatpush1.msra.mxu0 %v585
    %612 = vmatprep.subr.mxu0 0.0
    %613 = vmatpush1.msra.mxu0 %v586
    %614 = vmatprep.subr.mxu0 0.0
    %615 = vmatpush1.msra.mxu0 %v587
    %616 = vmatprep.subr.mxu0 0.0
    %617 = vmatpush1.msra.mxu0 %v588
    %618 = vmatprep.subr.mxu0 0.0
    %619 = vmatpush1.msra.mxu0 %v589
    %620 = vmatprep.subr.mxu0 0.0
    %621 = vmatpush1.msra.mxu0 %v590
    %622 = vmatprep.subr.mxu0 0.0
    %623 = vmatpush1.msra.mxu0 %v591
    %624 = vmatprep.subr.mxu0 0.0
    %625 = vmatpush1.msra.mxu0 %v592
    %626 = vmatprep.subr.mxu0 0.0
    %627 = vmatpush1.msra.mxu0 %v593
    %628 = vmatprep.subr.mxu0 0.0
    %629 = vmatpush1.msra.mxu0 %v594
    %630 = vmatprep.subr.mxu0 0.0
    %631 = vmatpush1.msra.mxu0 %v595
    %632 = vmatprep.subr.mxu0 0.0
    %633 = vmatpush1.msra.mxu0 %v596
    %634 = vmatprep.subr.mxu0 0.0
    %635 = vmatpush1.msra.mxu0 %v597
    %636 = vmatprep.subr.mxu0 0.0
    %637 = vmatpush1.msra.mxu0 %v598
    %638 = vmatprep.subr.mxu0 0.0
    %639 = vmatpush1.msra.mxu0 0.0
    %640 = vmatprep.subr.mxu0 0.0
    %641 = vmatpush1.msra.mxu0 0.0
    %642 = vmatprep.subr.mxu0 0.0
    %643 = vmatpush1.msra.mxu0 0.0
    %644 = vmatprep.subr.mxu0 0.0
    %645 = vmatpush1.msra.mxu0 0.0
    %646 = vmatprep.subr.mxu0 0.0
    %647 = vmatpush1.msra.mxu0 0.0
    %648 = vmatprep.subr.mxu0 0.0
    %649 = vmatpush1.msra.mxu0 0.0
    %650 = vmatprep.subr.mxu0 0.0
    %651 = vmatpush1.msra.mxu0 0.0
    %652 = vmatprep.subr.mxu0 0.0
    %653 = vmatpush1.msra.mxu0 0.0
    %654 = vmatprep.subr.mxu0 0.0
    %655 = vmatpush1.msra.mxu0 0.0
    %656 = vmatprep.subr.mxu0 0.0
    %657 = vmatpush1.msra.mxu0 0.0
    %658 = vmatprep.subr.mxu0 0.0
    %659 = vmatpush1.msra.mxu0 0.0
    %660 = vmatprep.subr.mxu0 0.0
    %661 = vmatpush1.msra.mxu0 0.0
    %662 = vmatprep.subr.mxu0 0.0
    %663 = vmatpush1.msra.mxu0 0.0
    %664 = vmatprep.subr.mxu0 0.0
    %665 = vmatpush1.msra.mxu0 0.0
    %666 = vmatprep.subr.mxu0 0.0
    %667 = vmatpush1.msra.mxu0 0.0
    %668 = vmatprep.subr.mxu0 0.0
    %669 = vmatpush1.msra.mxu0 0.0
    %670 = vmatprep.mubr.f32.mxu0 0.0
    %671 = vmatmul.mubr.f32.gmra.mrb[0].mxu0 %v581
    %v672 = vpop.f32.mrb[0].mxu0
    %v673 = vadd.f32 %v604, %v672
    %v674 = vpop.f32.mrb[0].mxu0
    %675 = vmatprep.mubr.f32.mxu0 0.0
    %676 = vmatmul.mubr.f32.gmra.mrb[0].mxu0 %v582
    %v677 = vpop.f32.mrb[0].mxu0
    %v678 = vadd.f32 %v604, %v677
    %v679 = vpop.f32.mrb[0].mxu0
    %680 = vdwg.mxu0
    %681 = vst.msk [vmem:[#allocation7] sm:$0xff] %vm174, %v673
    %682 = vst.msk [vmem:[#allocation7 + $0x8] sm:$0xff] %vm174, %v678
    // Predicated region
    $region38: #{mlps_forward.1} parent=1 // pred_check
      _
    $region39: #{mlps_forward.1} parent=1 // pred_check_branch
      %684 = sbr.rel (0) target = $region41
    $region40: #{mlps_forward.1} parent=1 // pred_region
      %s686 = ssub.s32 256, 256
      %687 = vsyncadd [#allocation4], %s686
      %s688 = sshll.u32 [#allocation7], 4
      %s689 = int_to_ptr.vmem [resolvable:$true] %s688
      %694 = dma.vmem_to_hbm [thread:$0]  %s689, 256, %s7, [#allocation4], 128, 128, 8
    $region41: #{mlps_forward.1} parent=1 // pred_fallthru
      _
    // Predicated region
    $region42: #{mlps_forward.1} parent=1 // pred_check
      _
    $region43: #{mlps_forward.1} parent=1 // pred_check_branch
      %696 = sbr.rel (0) target = $region45
    $region44: #{mlps_forward.1} parent=1 // pred_region
      %697 = dma.done [#allocation4], 256
    $region45: #{mlps_forward.1} parent=1 // pred_fallthru
      _
    %698 = vsyncpa [#allocation3], 1
    %699 = vsyncpa [#allocation6], 1
    %700 = vsyncpa [#allocation4], 1

</llo_original>
